<compile_context>
chip_gen: v7x
topology: tpu7x:2x2x1
jax: 0.10.0
libtpu: 0.0.40
codegen_flags: <defaults>
</compile_context>

<pallas_src>
import math
import functools

import jax
import jax.numpy as jnp
from jax import lax
from jax.experimental import pallas as pl
from jax.experimental.pallas import tpu as pltpu

_GELU_C = math.sqrt(2.0 / math.pi)


def _gelu_tanh(x):
    # PyTorch nn.GELU(approximate='tanh'):
    # 0.5 * x * (1 + tanh(sqrt(2/pi) * (x + 0.044715 * x^3)))
    # re-associated as x * (1 + 0.044715 * x^2) to reuse x*x (saves VALU ops);
    # tanh lands on the EUP slot.
    x2 = x * x
    return 0.5 * x * (1.0 + jnp.tanh(_GELU_C * x * (1.0 + 0.044715 * x2)))


# ----------------------------------------------------------------------------
# Kernels
# ----------------------------------------------------------------------------

def mlp_kernel_resident(x_ref, w1_ref, b1_ref, w2_ref, b2_ref, o_ref):
    """Grid = (M tiles,). Weights fully resident in VMEM (DMA'd once)."""
    # x_ref: (tm, C)  w1_ref: (C, H)  b1_ref: (1, H)  w2_ref: (H, C)
    # b2_ref: (1, C)  o_ref: (tm, C)
    h = jnp.dot(x_ref[...], w1_ref[...], preferred_element_type=jnp.float32)
    h = h + b1_ref[...].astype(jnp.float32)
    g = _gelu_tanh(h)
    y = jnp.dot(g.astype(w2_ref.dtype), w2_ref[...],
                preferred_element_type=jnp.float32)
    o_ref[...] = (y + b2_ref[...].astype(jnp.float32)).astype(o_ref.dtype)


def mlp_kernel_stream(x_ref, w1_ref, b1_ref, w2_ref, b2_ref, o_ref, acc_ref):
    """Grid = (M tiles [parallel], H chunks [arbitrary / reduction])."""
    # x_ref: (tm, C)   w1_ref: (C, th)  (leading chunk axis squeezed)
    # b1_ref: (1, th)  w2_ref: (th, C)  b2_ref: (1, C)
    # o_ref: (tm, C)   acc_ref: (tm, C) f32 scratch (persists over the H sweep)
    h_idx = pl.program_id(1)

    @pl.when(h_idx == 0)
    def _init():
        acc_ref[...] = jnp.zeros_like(acc_ref)

    h = jnp.dot(x_ref[...], w1_ref[...], preferred_element_type=jnp.float32)
    h = h + b1_ref[...].astype(jnp.float32)
    g = _gelu_tanh(h)

    acc_ref[...] += jnp.dot(g.astype(w2_ref.dtype), w2_ref[...],
                            preferred_element_type=jnp.float32)

    @pl.when(h_idx == pl.num_programs(1) - 1)
    def _finalize():
        o_ref[...] = (acc_ref[...]
                      + b2_ref[...].astype(jnp.float32)).astype(o_ref.dtype)


# ----------------------------------------------------------------------------
# Tile / VMEM budgeting helpers (all trace-time Python)
# ----------------------------------------------------------------------------

def _round_up(a, b):
    return (a + b - 1) // b * b


@functools.lru_cache(maxsize=1)
def _vmem_budget_bytes():
    """Explicit scoped-VMEM budget derived from the actual chip."""
    cap = 64 << 20  # conservative default (v7x per-TC VMEM)
    try:
        info = pltpu.get_tpu_info()
        cap = int(getattr(info, "vmem_capacity_bytes", cap))
    except Exception:
        pass
    if cap >= (128 << 20):    # v5e / v6e
        return 100 << 20
    return 48 << 20           # v7x (64 MiB per TensorCore)


def _resident_vmem_bytes(tm, C, H, itemsize):
    # Weights/biases + x/out tiles (x2 for pipeline buffering) plus the
    # compiler-materialized (tm, H) f32 intermediate and its bf16 copy.
    wb = (C * H + H * C + H + C) * itemsize
    xb = 2 * tm * C * itemsize
    tmp = tm * H * (4 + itemsize)
    return 2 * (wb + xb) + tmp


def _stream_vmem_bytes(tm, th, C, H, itemsize):
    per_step = (C * th + th * C + th + C) * itemsize + 2 * tm * C * itemsize
    tmp = tm * th * (4 + itemsize)
    acc = tm * C * 4
    return 2 * per_step + tmp + acc


def _divisor_chunks(H, th_max):
    """Divisors of H that are <= th_max, best (MXU/lane friendly, large) first."""
    th_max = min(th_max, H)
    divs = [d for d in range(1, H + 1) if H % d == 0 and d <= th_max]
    divs.sort(key=lambda d: (d % 256 == 0, d % 128 == 0, d), reverse=True)
    return divs


# ----------------------------------------------------------------------------
# Wrapper
# ----------------------------------------------------------------------------

@functools.partial(jax.jit, static_argnames=("tm", "th", "force_stream"))
def mlp_forward(x, w1, b1, w2, b2, *, tm=None, th=None, force_stream=False):
    """x: (B, T, C) -> (B, T, C), fused c_fc + GELU(tanh) + c_proj.

    Weight layout: w1 (C, H), b1 (1, H), w2 (H, C), b2 (1, C), i.e. both
    matmuls run as y = x @ W (+ b) on the MXU.  C need not be a multiple of
    128 (e.g. GPT-2 XL, C=1600): the block always spans the full C dim, so
    the store is merely partially lane-masked in that case.
    """
    B, T, C = x.shape
    H = w1.shape[1]  # 4 * C
    M = B * T
    itemsize = jnp.dtype(x.dtype).itemsize
    budget = _vmem_budget_bytes()

    # ---- M row tile -------------------------------------------------------
    if tm is None:
        tm = 1024 if budget >= (100 << 20) else 512
    tm_eff = min(tm, _round_up(M, 16))          # bf16 min sublane tile = 16
    # v7x megacore: ensure at least 2 row tiles when there is enough work.
    if M > 256 and pl.cdiv(M, tm_eff) < 2:
        tm_eff = max(128, _round_up(pl.cdiv(M, 2), 128))
    Mp = pl.cdiv(M, tm_eff) * tm_eff

    x2d = x.reshape(M, C)
    if Mp != M:
        x2d = jnp.pad(x2d, ((0, Mp - M), (0, 0)))

    resident = (not force_stream) and (
        _resident_vmem_bytes(tm_eff, C, H, itemsize) <= budget)

    flops = 4 * M * C * H          # two matmuls
    trans = M * H                  # one tanh per hidden element

    if resident:
        grid = (Mp // tm_eff,)
        bytes_accessed = (2 * Mp * C + 2 * C * H + H + C) * itemsize
        out2d = pl.pallas_call(
            mlp_kernel_resident,
            out_shape=jax.ShapeDtypeStruct((Mp, C), x.dtype),
            grid_spec=pltpu.PrefetchScalarGridSpec(
                num_scalar_prefetch=0,
                grid=grid,
                in_specs=[
                    pl.BlockSpec((tm_eff, C), lambda i: (i, 0)),  # x row tile
                    pl.BlockSpec((C, H), lambda i: (0, 0)),       # W1 resident
                    pl.BlockSpec((1, H), lambda i: (0, 0)),       # b1 resident
                    pl.BlockSpec((H, C), lambda i: (0, 0)),       # W2 resident
                    pl.BlockSpec((1, C), lambda i: (0, 0)),       # b2 resident
                ],
                out_specs=pl.BlockSpec((tm_eff, C), lambda i: (i, 0)),
            ),
            compiler_params=pltpu.CompilerParams(
                dimension_semantics=("parallel",),
                vmem_limit_bytes=int(budget)),
            cost_estimate=pl.CostEstimate(
                flops=flops, transcendentals=trans,
                bytes_accessed=int(bytes_accessed)),
        )(x2d, w1, b1, w2, b2)
    else:
        # ---- H chunk (streaming) -------------------------------------------
        if th is None:
            th = 2048 if budget >= (100 << 20) else 1024
        th_eff = None
        for d in _divisor_chunks(H, th):
            if _stream_vmem_bytes(tm_eff, d, C, H, itemsize) <= budget:
                th_eff = d
                break
        if th_eff is None:
            th_eff = _divisor_chunks(H, th)[-1]   # smallest divisor; last resort
        nH = H // th_eff

        # Contiguous W1 chunk DMAs: (C, H) -> (nH, C, th) once in the wrapper.
        w1_r = w1.reshape(C, nH, th_eff).transpose(1, 0, 2)

        grid = (Mp // tm_eff, nH)
        bytes_accessed = (2 * Mp * C
                          + (Mp // tm_eff) * 2 * C * H + H + C) * itemsize
        out2d = pl.pallas_call(
            mlp_kernel_stream,
            out_shape=jax.ShapeDtypeStruct((Mp, C), x.dtype),
            grid_spec=pltpu.PrefetchScalarGridSpec(
                num_scalar_prefetch=0,
                grid=grid,
                in_specs=[
                    pl.BlockSpec((tm_eff, C), lambda i, h: (i, 0)),      # x rows
                    pl.BlockSpec((None, C, th_eff),
                                 lambda i, h: (h, 0, 0)),                # W1 chunk (contiguous)
                    pl.BlockSpec((1, th_eff), lambda i, h: (0, h)),      # b1 chunk
                    pl.BlockSpec((th_eff, C), lambda i, h: (h, 0)),      # W2 chunk (contiguous)
                    pl.BlockSpec((1, C), lambda i, h: (0, 0)),           # b2
                ],
                out_specs=pl.BlockSpec((tm_eff, C), lambda i, h: (i, 0)),
                scratch_shapes=[pltpu.VMEM((tm_eff, C), jnp.float32)],
            ),
            compiler_params=pltpu.CompilerParams(
                dimension_semantics=("parallel", "arbitrary"),
                vmem_limit_bytes=int(budget)),
            cost_estimate=pl.CostEstimate(
                flops=flops, transcendentals=trans,
                bytes_accessed=int(bytes_accessed)),
        )(x2d, w1_r, b1, w2, b2)

    if Mp != M:
        out2d = out2d[:M]
    return out2d.reshape(B, T, C)


# ----------------------------------------------------------------------------
# Params / reference / demo
# ----------------------------------------------------------------------------

def init_params(key, n_embd, dtype=jnp.bfloat16):
    """Deterministic nn.Linear-style init (uniform +/- 1/sqrt(fan_in))."""
    h = 4 * n_embd
    k1, k2, k3, k4 = jax.random.split(key, 4)
    bound1 = 1.0 / math.sqrt(n_embd)
    bound2 = 1.0 / math.sqrt(h)
    w1 = jax.random.uniform(k1, (n_embd, h), jnp.float32, -bound1, bound1).astype(dtype)
    b1 = jax.random.uniform(k2, (1, h), jnp.float32, -bound1, bound1).astype(dtype)
    w2 = jax.random.uniform(k3, (h, n_embd), jnp.float32, -bound2, bound2).astype(dtype)
    b2 = jax.random.uniform(k4, (1, n_embd), jnp.float32, -bound2, bound2).astype(dtype)
    return w1, b1, w2, b2


def _reference(x, w1, b1, w2, b2):
    xf = x.astype(jnp.float32).reshape(-1, x.shape[-1])
    hf = jnp.dot(xf, w1.astype(jnp.float32),
                 precision=lax.Precision.HIGHEST) + b1.astype(jnp.float32)
    gf = _gelu_tanh(hf)
    yf = jnp.dot(gf, w2.astype(jnp.float32),
                 precision=lax.Precision.HIGHEST) + b2.astype(jnp.float32)
    return yf.reshape(x.shape)


if __name__ == "__main__":
    key = jax.random.PRNGKey(0)
    kx, kp = jax.random.split(key)

    # Small GPT-2-like config.
    B, T, n_embd = 2, 8, 128
    x = jax.random.normal(kx, (B, T, n_embd), jnp.float32).astype(jnp.bfloat16)
    w1, b1, w2, b2 = init_params(kp, n_embd, dtype=jnp.bfloat16)

    ref = _reference(x, w1, b1, w2, b2)

    # Resident-weights path (the default for realistic GPT-2 widths).
    out = jax.block_until_ready(mlp_forward(x, w1, b1, w2, b2))
    assert out.shape == (B, T, n_embd)
    assert jnp.allclose(out.astype(jnp.float32), ref, atol=3e-2, rtol=3e-2), (
        float(jnp.max(jnp.abs(out.astype(jnp.float32) - ref))))

    # Streaming (H-chunked) fallback path, forced with a small chunk so the
    # reduction init/accumulate/finalize logic is exercised too.
    out_s = jax.block_until_ready(
        mlp_forward(x, w1, b1, w2, b2, th=256, force_stream=True))
    assert jnp.allclose(out_s.astype(jnp.float32), ref, atol=3e-2, rtol=3e-2), (
        float(jnp.max(jnp.abs(out_s.astype(jnp.float32) - ref))))

    print("KERNEL_OK")
</pallas_src>

<mosaic_0001>
module attributes {stable_mosaic.version = 11 : i64} {
  func.func @mlp_kernel_resident(%arg0: i32, %arg1: memref<16x128xbf16, #tpu.memory_space<vmem>>, %arg2: memref<128x512xbf16, #tpu.memory_space<vmem>>, %arg3: memref<1x512xbf16, #tpu.memory_space<vmem>>, %arg4: memref<512x128xbf16, #tpu.memory_space<vmem>>, %arg5: memref<1x128xbf16, #tpu.memory_space<vmem>>, %arg6: memref<16x128xbf16, #tpu.memory_space<vmem>>) attributes {dimension_semantics = [#tpu.dimension_semantics<parallel>], iteration_bounds = array<i64: 1>, scalar_prefetch = 0 : i64, scratch_operands = 0 : i64, tpu.core_type = #tpu.core_type<tc>, window_params = [{transform_indices = @transform_0, window_bounds = array<i64: 16, 128>}, {pipeline_mode = #tpu.pipeline_mode<synchronous>, transform_indices = @transform_1, window_bounds = array<i64: 128, 512>}, {pipeline_mode = #tpu.pipeline_mode<synchronous>, transform_indices = @transform_2, window_bounds = array<i64: 1, 512>}, {pipeline_mode = #tpu.pipeline_mode<synchronous>, transform_indices = @transform_3, window_bounds = array<i64: 512, 128>}, {pipeline_mode = #tpu.pipeline_mode<synchronous>, transform_indices = @transform_4, window_bounds = array<i64: 1, 128>}, {transform_indices = @transform_5, window_bounds = array<i64: 16, 128>}]} {
    %c0 = arith.constant 0 : index
    %c0_0 = arith.constant 0 : index
    %0 = vector.load %arg1[%c0, %c0_0] : memref<16x128xbf16, #tpu.memory_space<vmem>>, vector<16x128xbf16>
    %c0_1 = arith.constant 0 : index
    %c0_2 = arith.constant 0 : index
    %1 = vector.load %arg2[%c0_1, %c0_2] : memref<128x512xbf16, #tpu.memory_space<vmem>>, vector<128x512xbf16>
    %cst = arith.constant dense<0.000000e+00> : vector<16x512xf32>
    %2 = tpu.matmul %0, %1, %cst {dimension_numbers = #tpu.dot_dimension_numbers<[1], [0], [0], [1], [0, 0, 1, 1], [], []>} : vector<16x128xbf16>, vector<128x512xbf16>, vector<16x512xf32> -> vector<16x512xf32>
    %c0_3 = arith.constant 0 : index
    %c0_4 = arith.constant 0 : index
    %3 = vector.load %arg3[%c0_3, %c0_4] : memref<1x512xbf16, #tpu.memory_space<vmem>>, vector<1x512xbf16>
    %4 = arith.extf %3 : vector<1x512xbf16> to vector<1x512xf32>
    %5 = vector.broadcast %4 : vector<1x512xf32> to vector<16x512xf32>
    %6 = arith.addf %2, %5 : vector<16x512xf32>
    %7 = arith.mulf %6, %6 : vector<16x512xf32>
    %cst_5 = arith.constant 5.000000e-01 : f32
    %8 = vector.broadcast %cst_5 : f32 to vector<16x512xf32>
    %9 = arith.mulf %8, %6 : vector<16x512xf32>
    %cst_6 = arith.constant 0.797884583 : f32
    %10 = vector.broadcast %cst_6 : f32 to vector<16x512xf32>
    %11 = arith.mulf %10, %6 : vector<16x512xf32>
    %cst_7 = arith.constant 4.471500e-02 : f32
    %12 = vector.broadcast %cst_7 : f32 to vector<16x512xf32>
    %13 = arith.mulf %12, %7 : vector<16x512xf32>
    %cst_8 = arith.constant 1.000000e+00 : f32
    %14 = vector.broadcast %cst_8 : f32 to vector<16x512xf32>
    %15 = arith.addf %14, %13 : vector<16x512xf32>
    %16 = arith.mulf %11, %15 : vector<16x512xf32>
    %17 = math.tanh %16 : vector<16x512xf32>
    %cst_9 = arith.constant 1.000000e+00 : f32
    %18 = vector.broadcast %cst_9 : f32 to vector<16x512xf32>
    %19 = arith.addf %18, %17 : vector<16x512xf32>
    %20 = arith.mulf %9, %19 : vector<16x512xf32>
    %21 = arith.truncf %20 : vector<16x512xf32> to vector<16x512xbf16>
    %c0_10 = arith.constant 0 : index
    %c0_11 = arith.constant 0 : index
    %22 = vector.load %arg4[%c0_10, %c0_11] : memref<512x128xbf16, #tpu.memory_space<vmem>>, vector<512x128xbf16>
    %cst_12 = arith.constant dense<0.000000e+00> : vector<16x128xf32>
    %23 = tpu.matmul %21, %22, %cst_12 {dimension_numbers = #tpu.dot_dimension_numbers<[1], [0], [0], [1], [0, 0, 1, 1], [], []>} : vector<16x512xbf16>, vector<512x128xbf16>, vector<16x128xf32> -> vector<16x128xf32>
    %c0_13 = arith.constant 0 : index
    %c0_14 = arith.constant 0 : index
    %24 = vector.load %arg5[%c0_13, %c0_14] : memref<1x128xbf16, #tpu.memory_space<vmem>>, vector<1x128xbf16>
    %25 = arith.extf %24 : vector<1x128xbf16> to vector<1x128xf32>
    %26 = vector.broadcast %25 : vector<1x128xf32> to vector<16x128xf32>
    %27 = arith.addf %23, %26 : vector<16x128xf32>
    %28 = arith.truncf %27 : vector<16x128xf32> to vector<16x128xbf16>
    %c0_15 = arith.constant 0 : index
    %c0_16 = arith.constant 0 : index
    %29 = vector.load %arg6[%c0_15, %c0_16] : memref<16x128xbf16, #tpu.memory_space<vmem>>, vector<16x128xbf16>
    tpu.vector_store %arg6[%c0_15, %c0_16], %28 {strides = array<i32>} : memref<16x128xbf16, #tpu.memory_space<vmem>>, vector<16x128xbf16>,
    return
  }
  func.func @transform_0(%arg0: i32) -> (i32, i32) {
    %c0_i32 = arith.constant 0 : i32
    %c0_i32_0 = arith.constant 0 : i32
    return %arg0, %c0_i32 : i32, i32
  }
  func.func @transform_1(%arg0: i32) -> (i32, i32) {
    %c0_i32 = arith.constant 0 : i32
    %c0_i32_0 = arith.constant 0 : i32
    %c0_i32_1 = arith.constant 0 : i32
    return %c0_i32, %c0_i32_0 : i32, i32
  }
  func.func @transform_2(%arg0: i32) -> (i32, i32) {
    %c0_i32 = arith.constant 0 : i32
    %c0_i32_0 = arith.constant 0 : i32
    %c0_i32_1 = arith.constant 0 : i32
    return %c0_i32, %c0_i32_0 : i32, i32
  }
  func.func @transform_3(%arg0: i32) -> (i32, i32) {
    %c0_i32 = arith.constant 0 : i32
    %c0_i32_0 = arith.constant 0 : i32
    %c0_i32_1 = arith.constant 0 : i32
    return %c0_i32, %c0_i32_0 : i32, i32
  }
  func.func @transform_4(%arg0: i32) -> (i32, i32) {
    %c0_i32 = arith.constant 0 : i32
    %c0_i32_0 = arith.constant 0 : i32
    %c0_i32_1 = arith.constant 0 : i32
    return %c0_i32, %c0_i32_0 : i32, i32
  }
  func.func @transform_5(%arg0: i32) -> (i32, i32) {
    %c0_i32 = arith.constant 0 : i32
    %c0_i32_0 = arith.constant 0 : i32
    return %arg0, %c0_i32 : i32, i32
  }
}

</mosaic_0001>

<llo_original>
// kernel: mlp_forward.1
$region0: #{mlp_forward.1}
  #allocation0 [shape = 'u32[]', space=smem, size = 0x4, offset = 0x4, fixed_abs, tag = 'smem constant byte address 0x4 - core index']
  #allocation1 [shape = 'u32[144,128]{1,0:T(1,128)}', space=vmem, size = 0x12000, scoped, tag = 'internal scratch']
  %s0 = inlined_call_operand.hbm [shape: bf16[16,128], index: 0, kind: input, shape index: {}]
  %s1 = inlined_call_operand.hbm [shape: bf16[128,512], index: 1, kind: input, shape index: {}]
  %s2 = inlined_call_operand.vmem [shape: bf16[1,512], index: 2, kind: input, shape index: {}]
  %s3 = inlined_call_operand.hbm [shape: bf16[512,128], index: 3, kind: input, shape index: {}]
  %s4 = inlined_call_operand.vmem [shape: bf16[1,128], index: 4, kind: input, shape index: {}]
  %s5 = inlined_call_operand.hbm [shape: bf16[16,128], index: 5, kind: output, shape index: {}]
  %s6 = sld [smem:[#allocation0]]
  $region42: #{mlp_forward.1} parent=0
    _
  %s8 = ssub.s32 1, %s6
  %s9 = scalar_select 0, %s8, %s6
  $region1: #{mlp_forward.1} parent=0
    #allocation2 [shape = 'u8[4096]{0}', space=vmem, size = 0x1000, scoped, tag = 'input window, operand 0, single buffered']
    #allocation3 [shape = 's32[1]{0}', space=sflag, size = 0x4, scoped, tag = 'scoped memory for mlp_forward.1']
    #allocation4 [shape = 's32[1]{0}', space=sflag, size = 0x4, scoped, tag = 'scoped memory for mlp_forward.1']
    #allocation5 [shape = 'u8[131072]{0}', space=vmem, size = 0x20000, scoped, tag = 'input window, operand 1, single buffered']
    #allocation6 [shape = 's32[1]{0}', space=sflag, size = 0x4, scoped, tag = 'scoped memory for mlp_forward.1']
    #allocation7 [shape = 'u8[131072]{0}', space=vmem, size = 0x20000, scoped, tag = 'input window, operand 3, single buffered']
    #allocation8 [shape = 'u8[4096]{0}', space=vmem, size = 0x1000, scoped, tag = 'output window, operand 0, single buffered']
    %10 = vsyncpa [#allocation3], 0
    %11 = vsyncpa [#allocation6], 0
    %12 = vsyncpa [#allocation4], 0
    // Predicated region
    $region2: #{mlp_forward.1} parent=1 // pred_check
      _
    $region3: #{mlp_forward.1} parent=1 // pred_check_branch
      %14 = sbr.rel (0) target = $region5
    $region4: #{mlp_forward.1} parent=1 // pred_region
      %s16 = ssub.s32 128, 128
      %17 = vsyncadd [#allocation3], %s16
      %s18 = sshll.u32 [#allocation2], 4
      %s19 = int_to_ptr.vmem [resolvable:$true] %s18
      %24 = dma.hbm_to_vmem [thread:$0]  %s0, 128, %s19, [#allocation3], 64, 64, 4
    $region5: #{mlp_forward.1} parent=1 // pred_fallthru
      _
    // Predicated region
    $region6: #{mlp_forward.1} parent=1 // pred_check
      _
    $region7: #{mlp_forward.1} parent=1 // pred_check_branch
      %26 = sbr.rel (0) target = $region9
    $region8: #{mlp_forward.1} parent=1 // pred_region
      %s28 = ssub.s32 4096, 4096
      %29 = vsyncadd [#allocation6], %s28
      %s30 = sshll.u32 [#allocation5], 4
      %s31 = int_to_ptr.vmem [resolvable:$true] %s30
      %36 = dma.hbm_to_vmem [thread:$0]  %s1, 4096, %s31, [#allocation6], 256, 256, 16
    $region9: #{mlp_forward.1} parent=1 // pred_fallthru
      _
    // Predicated region
    $region10: #{mlp_forward.1} parent=1 // pred_check
      _
    $region11: #{mlp_forward.1} parent=1 // pred_check_branch
      %38 = sbr.rel (0) target = $region13
    $region12: #{mlp_forward.1} parent=1 // pred_region
      _
    $region13: #{mlp_forward.1} parent=1 // pred_fallthru
      _
    // Predicated region
    $region14: #{mlp_forward.1} parent=1 // pred_check
      _
    $region15: #{mlp_forward.1} parent=1 // pred_check_branch
      %40 = sbr.rel (0) target = $region17
    $region16: #{mlp_forward.1} parent=1 // pred_region
      %s42 = ssub.s32 4096, 4096
      %43 = vsyncadd [#allocation6], %s42
      %s44 = sshll.u32 [#allocation7], 4
      %s45 = int_to_ptr.vmem [resolvable:$true] %s44
      %50 = dma.hbm_to_vmem [thread:$0]  %s3, 4096, %s45, [#allocation6], 64, 64, 4
    $region17: #{mlp_forward.1} parent=1 // pred_fallthru
      _
    // Predicated region
    $region18: #{mlp_forward.1} parent=1 // pred_check
      _
    $region19: #{mlp_forward.1} parent=1 // pred_check_branch
      %52 = sbr.rel (0) target = $region21
    $region20: #{mlp_forward.1} parent=1 // pred_region
      _
    $region21: #{mlp_forward.1} parent=1 // pred_fallthru
      _
    // Predicated region
    $region22: #{mlp_forward.1} parent=1 // pred_check
      _
    $region23: #{mlp_forward.1} parent=1 // pred_check_branch
      %54 = sbr.rel (0) target = $region25
    $region24: #{mlp_forward.1} parent=1 // pred_region
      %55 = dma.done [#allocation3], 128
    $region25: #{mlp_forward.1} parent=1 // pred_fallthru
      _
    // Predicated region
    $region26: #{mlp_forward.1} parent=1 // pred_check
      _
    $region27: #{mlp_forward.1} parent=1 // pred_check_branch
      %57 = sbr.rel (0) target = $region29
    $region28: #{mlp_forward.1} parent=1 // pred_region
      %58 = dma.done [#allocation6], 4096
    $region29: #{mlp_forward.1} parent=1 // pred_fallthru
      _
    // Predicated region
    $region30: #{mlp_forward.1} parent=1 // pred_check
      _
    $region31: #{mlp_forward.1} parent=1 // pred_check_branch
      %60 = sbr.rel (0) target = $region33
    $region32: #{mlp_forward.1} parent=1 // pred_region
      %61 = dma.done [#allocation6], 4096
    $region33: #{mlp_forward.1} parent=1 // pred_fallthru
      _
    %v63 = vld [vmem:[#allocation2] sm:$0xf]
    %v64 = vld [vmem:[#allocation2 + $0x4] sm:$0xf]
    %v65 = vld [vmem:[#allocation5] sm:$0xff]
    %v66 = vld [vmem:[#allocation5 + $0x8] sm:$0xff]
    %v67 = vld [vmem:[#allocation5 + $0x10] sm:$0xff]
    %v68 = vld [vmem:[#allocation5 + $0x18] sm:$0xff]
    %v69 = vld [vmem:[#allocation5 + $0x20] sm:$0xff]
    %v70 = vld [vmem:[#allocation5 + $0x28] sm:$0xff]
    %v71 = vld [vmem:[#allocation5 + $0x30] sm:$0xff]
    %v72 = vld [vmem:[#allocation5 + $0x38] sm:$0xff]
    %v73 = vld [vmem:[#allocation5 + $0x40] sm:$0xff]
    %v74 = vld [vmem:[#allocation5 + $0x48] sm:$0xff]
    %v75 = vld [vmem:[#allocation5 + $0x50] sm:$0xff]
    %v76 = vld [vmem:[#allocation5 + $0x58] sm:$0xff]
    %v77 = vld [vmem:[#allocation5 + $0x60] sm:$0xff]
    %v78 = vld [vmem:[#allocation5 + $0x68] sm:$0xff]
    %v79 = vld [vmem:[#allocation5 + $0x70] sm:$0xff]
    %v80 = vld [vmem:[#allocation5 + $0x78] sm:$0xff]
    %v81 = vld [vmem:[#allocation5 + $0x80] sm:$0xff]
    %v82 = vld [vmem:[#allocation5 + $0x88] sm:$0xff]
    %v83 = vld [vmem:[#allocation5 + $0x90] sm:$0xff]
    %v84 = vld [vmem:[#allocation5 + $0x98] sm:$0xff]
    %v85 = vld [vmem:[#allocation5 + $0xa0] sm:$0xff]
    %v86 = vld [vmem:[#allocation5 + $0xa8] sm:$0xff]
    %v87 = vld [vmem:[#allocation5 + $0xb0] sm:$0xff]
    %v88 = vld [vmem:[#allocation5 + $0xb8] sm:$0xff]
    %v89 = vld [vmem:[#allocation5 + $0xc0] sm:$0xff]
    %v90 = vld [vmem:[#allocation5 + $0xc8] sm:$0xff]
    %v91 = vld [vmem:[#allocation5 + $0xd0] sm:$0xff]
    %v92 = vld [vmem:[#allocation5 + $0xd8] sm:$0xff]
    %v93 = vld [vmem:[#allocation5 + $0xe0] sm:$0xff]
    %v94 = vld [vmem:[#allocation5 + $0xe8] sm:$0xff]
    %v95 = vld [vmem:[#allocation5 + $0xf0] sm:$0xff]
    %v96 = vld [vmem:[#allocation5 + $0xf8] sm:$0xff]
    %v97 = vld [vmem:[%s2] sm:$0xf]
    %v98 = vunpack.c.l.bf16 %v97
    %v100 = vlaneseq
    %v101 = vshrl.u32 %v100, 7
    %v102 = vsub.s32 0, %v101
    %v103 = vrot.slane %v98, %v102
    %v104 = vlaneseq
    %v105 = vshrl.u32 %v104, 7
    %v106 = vsub.s32 2, %v105
    %v107 = vrot.slane %v98, %v106
    %v108 = vlaneseq
    %v109 = vshrl.u32 %v108, 7
    %v110 = vsub.s32 4, %v109
    %v111 = vrot.slane %v98, %v110
    %v112 = vlaneseq
    %v113 = vshrl.u32 %v112, 7
    %v114 = vsub.s32 6, %v113
    %v115 = vrot.slane %v98, %v114
    %v120 = vlaneseq
    %v121 = vshrl.u32 %v120, 7
    %v122 = vsub.s32 0, %v121
    %v123 = vrot.slane %v103, %v122
    %v124 = vlaneseq
    %v125 = vshrl.u32 %v124, 7
    %v126 = vsub.s32 0, %v125
    %v127 = vrot.slane %v107, %v126
    %v128 = vlaneseq
    %v129 = vshrl.u32 %v128, 7
    %v130 = vsub.s32 0, %v129
    %v131 = vrot.slane %v111, %v130
    %v132 = vlaneseq
    %v133 = vshrl.u32 %v132, 7
    %v134 = vsub.s32 0, %v133
    %v135 = vrot.slane %v115, %v134
    %v138 = vunpack.c.l.b16 %v63
    %v139 = vunpack.c.l.b16 %v64
    %v140 = vpack.c.b16 %v139, %v138
    %v174 = vunpack.c.l.b16 %v65
    %v175 = vunpack.c.h.b16 %v65
    %v176 = vunpack.c.l.b16 %v66
    %v177 = vunpack.c.h.b16 %v66
    %v178 = vunpack.c.l.b16 %v67
    %v179 = vunpack.c.h.b16 %v67
    %v180 = vunpack.c.l.b16 %v68
    %v181 = vunpack.c.h.b16 %v68
    %v182 = vunpack.c.l.b16 %v69
    %v183 = vunpack.c.h.b16 %v69
    %v184 = vunpack.c.l.b16 %v70
    %v185 = vunpack.c.h.b16 %v70
    %v186 = vunpack.c.l.b16 %v71
    %v187 = vunpack.c.h.b16 %v71
    %v188 = vunpack.c.l.b16 %v72
    %v189 = vunpack.c.h.b16 %v72
    %v190 = vunpack.c.l.b16 %v73
    %v191 = vunpack.c.h.b16 %v73
    %v192 = vunpack.c.l.b16 %v74
    %v193 = vunpack.c.h.b16 %v74
    %v194 = vunpack.c.l.b16 %v75
    %v195 = vunpack.c.h.b16 %v75
    %v196 = vunpack.c.l.b16 %v76
    %v197 = vunpack.c.h.b16 %v76
    %v198 = vunpack.c.l.b16 %v77
    %v199 = vunpack.c.h.b16 %v77
    %v200 = vunpack.c.l.b16 %v78
    %v201 = vunpack.c.h.b16 %v78
    %v202 = vunpack.c.l.b16 %v79
    %v203 = vunpack.c.h.b16 %v79
    %v204 = vunpack.c.l.b16 %v80
    %v205 = vunpack.c.h.b16 %v80
    %v206 = vunpack.c.l.b16 %v81
    %v207 = vunpack.c.h.b16 %v81
    %v208 = vunpack.c.l.b16 %v82
    %v209 = vunpack.c.h.b16 %v82
    %v210 = vunpack.c.l.b16 %v83
    %v211 = vunpack.c.h.b16 %v83
    %v212 = vunpack.c.l.b16 %v84
    %v213 = vunpack.c.h.b16 %v84
    %v214 = vunpack.c.l.b16 %v85
    %v215 = vunpack.c.h.b16 %v85
    %v216 = vunpack.c.l.b16 %v86
    %v217 = vunpack.c.h.b16 %v86
    %v218 = vunpack.c.l.b16 %v87
    %v219 = vunpack.c.h.b16 %v87
    %v220 = vunpack.c.l.b16 %v88
    %v221 = vunpack.c.h.b16 %v88
    %v222 = vunpack.c.l.b16 %v89
    %v223 = vunpack.c.h.b16 %v89
    %v224 = vunpack.c.l.b16 %v90
    %v225 = vunpack.c.h.b16 %v90
    %v226 = vunpack.c.l.b16 %v91
    %v227 = vunpack.c.h.b16 %v91
    %v228 = vunpack.c.l.b16 %v92
    %v229 = vunpack.c.h.b16 %v92
    %v230 = vunpack.c.l.b16 %v93
    %v231 = vunpack.c.h.b16 %v93
    %v232 = vunpack.c.l.b16 %v94
    %v233 = vunpack.c.h.b16 %v94
    %v234 = vunpack.c.l.b16 %v95
    %v235 = vunpack.c.h.b16 %v95
    %v236 = vunpack.c.l.b16 %v96
    %v237 = vunpack.c.h.b16 %v96
    %v238 = vpack.c.b16 %v178, %v174
    %v239 = vpack.c.b16 %v179, %v175
    %v240 = vpack.c.b16 %v180, %v176
    %v241 = vpack.c.b16 %v181, %v177
    %v242 = vpack.c.b16 %v186, %v182
    %v243 = vpack.c.b16 %v187, %v183
    %v244 = vpack.c.b16 %v188, %v184
    %v245 = vpack.c.b16 %v189, %v185
    %v246 = vpack.c.b16 %v194, %v190
    %v247 = vpack.c.b16 %v195, %v191
    %v248 = vpack.c.b16 %v196, %v192
    %v249 = vpack.c.b16 %v197, %v193
    %v250 = vpack.c.b16 %v202, %v198
    %v251 = vpack.c.b16 %v203, %v199
    %v252 = vpack.c.b16 %v204, %v200
    %v253 = vpack.c.b16 %v205, %v201
    %v254 = vpack.c.b16 %v210, %v206
    %v255 = vpack.c.b16 %v211, %v207
    %v256 = vpack.c.b16 %v212, %v208
    %v257 = vpack.c.b16 %v213, %v209
    %v258 = vpack.c.b16 %v218, %v214
    %v259 = vpack.c.b16 %v219, %v215
    %v260 = vpack.c.b16 %v220, %v216
    %v261 = vpack.c.b16 %v221, %v217
    %v262 = vpack.c.b16 %v226, %v222
    %v263 = vpack.c.b16 %v227, %v223
    %v264 = vpack.c.b16 %v228, %v224
    %v265 = vpack.c.b16 %v229, %v225
    %v266 = vpack.c.b16 %v234, %v230
    %v267 = vpack.c.b16 %v235, %v231
    %v268 = vpack.c.b16 %v236, %v232
    %v269 = vpack.c.b16 %v237, %v233
    %302 = vmatprep.subr.bf16.mxu0 %v239
    %303 = vmatpush1.bf16.msra.mxu0 %v238
    %304 = vmatprep.subr.bf16.mxu0 %v243
    %305 = vmatpush1.bf16.msra.mxu0 %v242
    %306 = vmatprep.subr.bf16.mxu0 %v247
    %307 = vmatpush1.bf16.msra.mxu0 %v246
    %308 = vmatprep.subr.bf16.mxu0 %v251
    %309 = vmatpush1.bf16.msra.mxu0 %v250
    %310 = vmatprep.subr.bf16.mxu0 %v255
    %311 = vmatpush1.bf16.msra.mxu0 %v254
    %312 = vmatprep.subr.bf16.mxu0 %v259
    %313 = vmatpush1.bf16.msra.mxu0 %v258
    %314 = vmatprep.subr.bf16.mxu0 %v263
    %315 = vmatpush1.bf16.msra.mxu0 %v262
    %316 = vmatprep.subr.bf16.mxu0 %v267
    %317 = vmatpush1.bf16.msra.mxu0 %v266
    %318 = vmatprep.subr.bf16.mxu0 0
    %319 = vmatpush1.bf16.msra.mxu0 0
    %320 = vmatprep.subr.bf16.mxu0 0
    %321 = vmatpush1.bf16.msra.mxu0 0
    %322 = vmatprep.subr.bf16.mxu0 0
    %323 = vmatpush1.bf16.msra.mxu0 0
    %324 = vmatprep.subr.bf16.mxu0 0
    %325 = vmatpush1.bf16.msra.mxu0 0
    %326 = vmatprep.subr.bf16.mxu0 0
    %327 = vmatpush1.bf16.msra.mxu0 0
    %328 = vmatprep.subr.bf16.mxu0 0
    %329 = vmatpush1.bf16.msra.mxu0 0
    %330 = vmatprep.subr.bf16.mxu0 0
    %331 = vmatpush1.bf16.msra.mxu0 0
    %332 = vmatprep.subr.bf16.mxu0 0
    %333 = vmatpush1.bf16.msra.mxu0 0
    %334 = vmatprep.mubr.bf16.mxu0 0
    %335 = vmatmul.mubr.bf16.gmra.mrb[0].mxu0 %v140
    %v336 = vpop.f32.mrb[0].mxu0
    %v337 = vadd.f32 %v123, %v336
    %v338 = vpop.f32.mrb[0].mxu0
    %v339 = vadd.f32 %v127, %v338
    %v340 = vpop.f32.mrb[0].mxu0
    %v341 = vadd.f32 %v123, %v340
    %v342 = vpop.f32.mrb[0].mxu0
    %v343 = vadd.f32 %v127, %v342
    %344 = vdwg.mxu0
    %345 = vmatprep.subr.bf16.mxu0 %v241
    %346 = vmatpush1.bf16.msra.mxu0 %v240
    %347 = vmatprep.subr.bf16.mxu0 %v245
    %348 = vmatpush1.bf16.msra.mxu0 %v244
    %349 = vmatprep.subr.bf16.mxu0 %v249
    %350 = vmatpush1.bf16.msra.mxu0 %v248
    %351 = vmatprep.subr.bf16.mxu0 %v253
    %352 = vmatpush1.bf16.msra.mxu0 %v252
    %353 = vmatprep.subr.bf16.mxu0 %v257
    %354 = vmatpush1.bf16.msra.mxu0 %v256
    %355 = vmatprep.subr.bf16.mxu0 %v261
    %356 = vmatpush1.bf16.msra.mxu0 %v260
    %357 = vmatprep.subr.bf16.mxu0 %v265
    %358 = vmatpush1.bf16.msra.mxu0 %v264
    %359 = vmatprep.subr.bf16.mxu0 %v269
    %360 = vmatpush1.bf16.msra.mxu0 %v268
    %361 = vmatprep.subr.bf16.mxu0 0
    %362 = vmatpush1.bf16.msra.mxu0 0
    %363 = vmatprep.subr.bf16.mxu0 0
    %364 = vmatpush1.bf16.msra.mxu0 0
    %365 = vmatprep.subr.bf16.mxu0 0
    %366 = vmatpush1.bf16.msra.mxu0 0
    %367 = vmatprep.subr.bf16.mxu0 0
    %368 = vmatpush1.bf16.msra.mxu0 0
    %369 = vmatprep.subr.bf16.mxu0 0
    %370 = vmatpush1.bf16.msra.mxu0 0
    %371 = vmatprep.subr.bf16.mxu0 0
    %372 = vmatpush1.bf16.msra.mxu0 0
    %373 = vmatprep.subr.bf16.mxu0 0
    %374 = vmatpush1.bf16.msra.mxu0 0
    %375 = vmatprep.subr.bf16.mxu0 0
    %376 = vmatpush1.bf16.msra.mxu0 0
    %377 = vmatprep.mubr.bf16.mxu0 0
    %378 = vmatmul.mubr.bf16.gmra.mrb[0].mxu0 %v140
    %v379 = vpop.f32.mrb[0].mxu0
    %v380 = vadd.f32 %v131, %v379
    %v381 = vpop.f32.mrb[0].mxu0
    %v382 = vadd.f32 %v135, %v381
    %v383 = vpop.f32.mrb[0].mxu0
    %v384 = vadd.f32 %v131, %v383
    %v385 = vpop.f32.mrb[0].mxu0
    %v386 = vadd.f32 %v135, %v385
    %387 = vdwg.mxu0
    %v388 = vmul.f32 %v337, %v337
    %v389 = vmul.f32 %v339, %v339
    %v390 = vmul.f32 %v380, %v380
    %v391 = vmul.f32 %v382, %v382
    %v392 = vmul.f32 %v341, %v341
    %v393 = vmul.f32 %v343, %v343
    %v394 = vmul.f32 %v384, %v384
    %v395 = vmul.f32 %v386, %v386
    %v396 = vmul.f32 %v337, 0.5
    %v397 = vmul.f32 %v339, 0.5
    %v398 = vmul.f32 %v380, 0.5
    %v399 = vmul.f32 %v382, 0.5
    %v400 = vmul.f32 %v341, 0.5
    %v401 = vmul.f32 %v343, 0.5
    %v402 = vmul.f32 %v384, 0.5
    %v403 = vmul.f32 %v386, 0.5
    %v404 = vmul.f32 %v337, 0.7978846
    %v405 = vmul.f32 %v339, 0.7978846
    %v406 = vmul.f32 %v380, 0.7978846
    %v407 = vmul.f32 %v382, 0.7978846
    %v408 = vmul.f32 %v341, 0.7978846
    %v409 = vmul.f32 %v343, 0.7978846
    %v410 = vmul.f32 %v384, 0.7978846
    %v411 = vmul.f32 %v386, 0.7978846
    %v412 = vmul.f32 %v388, 0.044715
    %v413 = vmul.f32 %v389, 0.044715
    %v414 = vmul.f32 %v390, 0.044715
    %v415 = vmul.f32 %v391, 0.044715
    %v416 = vmul.f32 %v392, 0.044715
    %v417 = vmul.f32 %v393, 0.044715
    %v418 = vmul.f32 %v394, 0.044715
    %v419 = vmul.f32 %v395, 0.044715
    %v420 = vadd.f32 %v412, 1.0
    %v421 = vadd.f32 %v413, 1.0
    %v422 = vadd.f32 %v414, 1.0
    %v423 = vadd.f32 %v415, 1.0
    %v424 = vadd.f32 %v416, 1.0
    %v425 = vadd.f32 %v417, 1.0
    %v426 = vadd.f32 %v418, 1.0
    %v427 = vadd.f32 %v419, 1.0
    %v428 = vmul.f32 %v404, %v420
    %v429 = vmul.f32 %v405, %v421
    %v430 = vmul.f32 %v406, %v422
    %v431 = vmul.f32 %v407, %v423
    %v432 = vmul.f32 %v408, %v424
    %v433 = vmul.f32 %v409, %v425
    %v434 = vmul.f32 %v410, %v426
    %v435 = vmul.f32 %v411, %v427
    %v436 = vtanh.pop %v428
    %v437 = vtanh.pop %v429
    %v438 = vtanh.pop %v430
    %v439 = vtanh.pop %v431
    %v440 = vtanh.pop %v432
    %v441 = vtanh.pop %v433
    %v442 = vtanh.pop %v434
    %v443 = vtanh.pop %v435
    %v444 = vadd.f32 %v436, 1.0
    %v445 = vadd.f32 %v437, 1.0
    %v446 = vadd.f32 %v438, 1.0
    %v447 = vadd.f32 %v439, 1.0
    %v448 = vadd.f32 %v440, 1.0
    %v449 = vadd.f32 %v441, 1.0
    %v450 = vadd.f32 %v442, 1.0
    %v451 = vadd.f32 %v443, 1.0
    %v452 = vmul.f32 %v396, %v444
    %v453 = vmul.f32 %v397, %v445
    %v454 = vmul.f32 %v398, %v446
    %v455 = vmul.f32 %v399, %v447
    %v456 = vmul.f32 %v400, %v448
    %v457 = vmul.f32 %v401, %v449
    %v458 = vmul.f32 %v402, %v450
    %v459 = vmul.f32 %v403, %v451
    %v460 = vpack.c.bf16 %v456, %v452
    %v461 = vpack.c.bf16 %v457, %v453
    %v462 = vpack.c.bf16 %v458, %v454
    %v463 = vpack.c.bf16 %v459, %v455
    %v464 = vld [vmem:[#allocation7] sm:$0xf]
    %v465 = vld [vmem:[#allocation7 + $0x4] sm:$0xf]
    %v466 = vld [vmem:[#allocation7 + $0x8] sm:$0xf]
    %v467 = vld [vmem:[#allocation7 + $0xc] sm:$0xf]
    %v468 = vld [vmem:[#allocation7 + $0x10] sm:$0xf]
    %v469 = vld [vmem:[#allocation7 + $0x14] sm:$0xf]
    %v470 = vld [vmem:[#allocation7 + $0x18] sm:$0xf]
    %v471 = vld [vmem:[#allocation7 + $0x1c] sm:$0xf]
    %v472 = vld [vmem:[#allocation7 + $0x20] sm:$0xf]
    %v473 = vld [vmem:[#allocation7 + $0x24] sm:$0xf]
    %v474 = vld [vmem:[#allocation7 + $0x28] sm:$0xf]
    %v475 = vld [vmem:[#allocation7 + $0x2c] sm:$0xf]
    %v476 = vld [vmem:[#allocation7 + $0x30] sm:$0xf]
    %v477 = vld [vmem:[#allocation7 + $0x34] sm:$0xf]
    %v478 = vld [vmem:[#allocation7 + $0x38] sm:$0xf]
    %v479 = vld [vmem:[#allocation7 + $0x3c] sm:$0xf]
    %v480 = vld [vmem:[#allocation7 + $0x40] sm:$0xf]
    %v481 = vld [vmem:[#allocation7 + $0x44] sm:$0xf]
    %v482 = vld [vmem:[#allocation7 + $0x48] sm:$0xf]
    %v483 = vld [vmem:[#allocation7 + $0x4c] sm:$0xf]
    %v484 = vld [vmem:[#allocation7 + $0x50] sm:$0xf]
    %v485 = vld [vmem:[#allocation7 + $0x54] sm:$0xf]
    %v486 = vld [vmem:[#allocation7 + $0x58] sm:$0xf]
    %v487 = vld [vmem:[#allocation7 + $0x5c] sm:$0xf]
    %v488 = vld [vmem:[#allocation7 + $0x60] sm:$0xf]
    %v489 = vld [vmem:[#allocation7 + $0x64] sm:$0xf]
    %v490 = vld [vmem:[#allocation7 + $0x68] sm:$0xf]
    %v491 = vld [vmem:[#allocation7 + $0x6c] sm:$0xf]
    %v492 = vld [vmem:[#allocation7 + $0x70] sm:$0xf]
    %v493 = vld [vmem:[#allocation7 + $0x74] sm:$0xf]
    %v494 = vld [vmem:[#allocation7 + $0x78] sm:$0xf]
    %v495 = vld [vmem:[#allocation7 + $0x7c] sm:$0xf]
    %v496 = vld [vmem:[#allocation7 + $0x80] sm:$0xf]
    %v497 = vld [vmem:[#allocation7 + $0x84] sm:$0xf]
    %v498 = vld [vmem:[#allocation7 + $0x88] sm:$0xf]
    %v499 = vld [vmem:[#allocation7 + $0x8c] sm:$0xf]
    %v500 = vld [vmem:[#allocation7 + $0x90] sm:$0xf]
    %v501 = vld [vmem:[#allocation7 + $0x94] sm:$0xf]
    %v502 = vld [vmem:[#allocation7 + $0x98] sm:$0xf]
    %v503 = vld [vmem:[#allocation7 + $0x9c] sm:$0xf]
    %v504 = vld [vmem:[#allocation7 + $0xa0] sm:$0xf]
    %v505 = vld [vmem:[#allocation7 + $0xa4] sm:$0xf]
    %v506 = vld [vmem:[#allocation7 + $0xa8] sm:$0xf]
    %v507 = vld [vmem:[#allocation7 + $0xac] sm:$0xf]
    %v508 = vld [vmem:[#allocation7 + $0xb0] sm:$0xf]
    %v509 = vld [vmem:[#allocation7 + $0xb4] sm:$0xf]
    %v510 = vld [vmem:[#allocation7 + $0xb8] sm:$0xf]
    %v511 = vld [vmem:[#allocation7 + $0xbc] sm:$0xf]
    %v512 = vld [vmem:[#allocation7 + $0xc0] sm:$0xf]
    %v513 = vld [vmem:[#allocation7 + $0xc4] sm:$0xf]
    %v514 = vld [vmem:[#allocation7 + $0xc8] sm:$0xf]
    %v515 = vld [vmem:[#allocation7 + $0xcc] sm:$0xf]
    %v516 = vld [vmem:[#allocation7 + $0xd0] sm:$0xf]
    %v517 = vld [vmem:[#allocation7 + $0xd4] sm:$0xf]
    %v518 = vld [vmem:[#allocation7 + $0xd8] sm:$0xf]
    %v519 = vld [vmem:[#allocation7 + $0xdc] sm:$0xf]
    %v520 = vld [vmem:[#allocation7 + $0xe0] sm:$0xf]
    %v521 = vld [vmem:[#allocation7 + $0xe4] sm:$0xf]
    %v522 = vld [vmem:[#allocation7 + $0xe8] sm:$0xf]
    %v523 = vld [vmem:[#allocation7 + $0xec] sm:$0xf]
    %v524 = vld [vmem:[#allocation7 + $0xf0] sm:$0xf]
    %v525 = vld [vmem:[#allocation7 + $0xf4] sm:$0xf]
    %v526 = vld [vmem:[#allocation7 + $0xf8] sm:$0xf]
    %v527 = vld [vmem:[#allocation7 + $0xfc] sm:$0xf]
    %v528 = vld [vmem:[%s4] sm:$0x1]
    %v529 = vunpack.c.l.bf16 %v528
    %v530 = vlaneseq
    %v531 = vshrl.u32 %v530, 7
    %v532 = vsub.s32 0, %v531
    %v533 = vrot.slane %v529, %v532
    %v598 = vunpack.c.l.b16 %v464
    %v599 = vunpack.c.l.b16 %v465
    %v600 = vunpack.c.l.b16 %v466
    %v601 = vunpack.c.l.b16 %v467
    %v602 = vunpack.c.l.b16 %v468
    %v603 = vunpack.c.l.b16 %v469
    %v604 = vunpack.c.l.b16 %v470
    %v605 = vunpack.c.l.b16 %v471
    %v606 = vunpack.c.l.b16 %v472
    %v607 = vunpack.c.l.b16 %v473
    %v608 = vunpack.c.l.b16 %v474
    %v609 = vunpack.c.l.b16 %v475
    %v610 = vunpack.c.l.b16 %v476
    %v611 = vunpack.c.l.b16 %v477
    %v612 = vunpack.c.l.b16 %v478
    %v613 = vunpack.c.l.b16 %v479
    %v614 = vunpack.c.l.b16 %v480
    %v615 = vunpack.c.l.b16 %v481
    %v616 = vunpack.c.l.b16 %v482
    %v617 = vunpack.c.l.b16 %v483
    %v618 = vunpack.c.l.b16 %v484
    %v619 = vunpack.c.l.b16 %v485
    %v620 = vunpack.c.l.b16 %v486
    %v621 = vunpack.c.l.b16 %v487
    %v622 = vunpack.c.l.b16 %v488
    %v623 = vunpack.c.l.b16 %v489
    %v624 = vunpack.c.l.b16 %v490
    %v625 = vunpack.c.l.b16 %v491
    %v626 = vunpack.c.l.b16 %v492
    %v627 = vunpack.c.l.b16 %v493
    %v628 = vunpack.c.l.b16 %v494
    %v629 = vunpack.c.l.b16 %v495
    %v630 = vunpack.c.l.b16 %v496
    %v631 = vunpack.c.l.b16 %v497
    %v632 = vunpack.c.l.b16 %v498
    %v633 = vunpack.c.l.b16 %v499
    %v634 = vunpack.c.l.b16 %v500
    %v635 = vunpack.c.l.b16 %v501
    %v636 = vunpack.c.l.b16 %v502
    %v637 = vunpack.c.l.b16 %v503
    %v638 = vunpack.c.l.b16 %v504
    %v639 = vunpack.c.l.b16 %v505
    %v640 = vunpack.c.l.b16 %v506
    %v641 = vunpack.c.l.b16 %v507
    %v642 = vunpack.c.l.b16 %v508
    %v643 = vunpack.c.l.b16 %v509
    %v644 = vunpack.c.l.b16 %v510
    %v645 = vunpack.c.l.b16 %v511
    %v646 = vunpack.c.l.b16 %v512
    %v647 = vunpack.c.l.b16 %v513
    %v648 = vunpack.c.l.b16 %v514
    %v649 = vunpack.c.l.b16 %v515
    %v650 = vunpack.c.l.b16 %v516
    %v651 = vunpack.c.l.b16 %v517
    %v652 = vunpack.c.l.b16 %v518
    %v653 = vunpack.c.l.b16 %v519
    %v654 = vunpack.c.l.b16 %v520
    %v655 = vunpack.c.l.b16 %v521
    %v656 = vunpack.c.l.b16 %v522
    %v657 = vunpack.c.l.b16 %v523
    %v658 = vunpack.c.l.b16 %v524
    %v659 = vunpack.c.l.b16 %v525
    %v660 = vunpack.c.l.b16 %v526
    %v661 = vunpack.c.l.b16 %v527
    %v662 = vpack.c.b16 %v599, %v598
    %v663 = vpack.c.b16 %v601, %v600
    %v664 = vpack.c.b16 %v603, %v602
    %v665 = vpack.c.b16 %v605, %v604
    %v666 = vpack.c.b16 %v607, %v606
    %v667 = vpack.c.b16 %v609, %v608
    %v668 = vpack.c.b16 %v611, %v610
    %v669 = vpack.c.b16 %v613, %v612
    %v670 = vpack.c.b16 %v615, %v614
    %v671 = vpack.c.b16 %v617, %v616
    %v672 = vpack.c.b16 %v619, %v618
    %v673 = vpack.c.b16 %v621, %v620
    %v674 = vpack.c.b16 %v623, %v622
    %v675 = vpack.c.b16 %v625, %v624
    %v676 = vpack.c.b16 %v627, %v626
    %v677 = vpack.c.b16 %v629, %v628
    %v678 = vpack.c.b16 %v631, %v630
    %v679 = vpack.c.b16 %v633, %v632
    %v680 = vpack.c.b16 %v635, %v634
    %v681 = vpack.c.b16 %v637, %v636
    %v682 = vpack.c.b16 %v639, %v638
    %v683 = vpack.c.b16 %v641, %v640
    %v684 = vpack.c.b16 %v643, %v642
    %v685 = vpack.c.b16 %v645, %v644
    %v686 = vpack.c.b16 %v647, %v646
    %v687 = vpack.c.b16 %v649, %v648
    %v688 = vpack.c.b16 %v651, %v650
    %v689 = vpack.c.b16 %v653, %v652
    %v690 = vpack.c.b16 %v655, %v654
    %v691 = vpack.c.b16 %v657, %v656
    %v692 = vpack.c.b16 %v659, %v658
    %v693 = vpack.c.b16 %v661, %v660
    %726 = vmatprep.subr.bf16.mxu0 0
    %727 = vmatpush1.bf16.msra.mxu0 %v662
    %728 = vmatprep.subr.bf16.mxu0 0
    %729 = vmatpush1.bf16.msra.mxu0 %v663
    %730 = vmatprep.subr.bf16.mxu0 0
    %731 = vmatpush1.bf16.msra.mxu0 %v664
    %732 = vmatprep.subr.bf16.mxu0 0
    %733 = vmatpush1.bf16.msra.mxu0 %v665
    %734 = vmatprep.subr.bf16.mxu0 0
    %735 = vmatpush1.bf16.msra.mxu0 %v666
    %736 = vmatprep.subr.bf16.mxu0 0
    %737 = vmatpush1.bf16.msra.mxu0 %v667
    %738 = vmatprep.subr.bf16.mxu0 0
    %739 = vmatpush1.bf16.msra.mxu0 %v668
    %740 = vmatprep.subr.bf16.mxu0 0
    %741 = vmatpush1.bf16.msra.mxu0 %v669
    %742 = vmatprep.subr.bf16.mxu0 0
    %743 = vmatpush1.bf16.msra.mxu0 %v670
    %744 = vmatprep.subr.bf16.mxu0 0
    %745 = vmatpush1.bf16.msra.mxu0 %v671
    %746 = vmatprep.subr.bf16.mxu0 0
    %747 = vmatpush1.bf16.msra.mxu0 %v672
    %748 = vmatprep.subr.bf16.mxu0 0
    %749 = vmatpush1.bf16.msra.mxu0 %v673
    %750 = vmatprep.subr.bf16.mxu0 0
    %751 = vmatpush1.bf16.msra.mxu0 %v674
    %752 = vmatprep.subr.bf16.mxu0 0
    %753 = vmatpush1.bf16.msra.mxu0 %v675
    %754 = vmatprep.subr.bf16.mxu0 0
    %755 = vmatpush1.bf16.msra.mxu0 %v676
    %756 = vmatprep.subr.bf16.mxu0 0
    %757 = vmatpush1.bf16.msra.mxu0 %v677
    %758 = vmatprep.mubr.bf16.mxu0 %v461
    %759 = vmatmul.mubr.bf16.gmra.mrb[0].mxu0 %v460
    %v760 = vpop.f32.mrb[0].mxu0
    %v761 = vadd.f32 %v533, %v760
    %v762 = vpop.f32.mrb[0].mxu0
    %v763 = vpop.f32.mrb[0].mxu0
    %v764 = vadd.f32 %v533, %v763
    %v765 = vpop.f32.mrb[0].mxu0
    %766 = vdwg.mxu0
    %767 = vmatprep.subr.bf16.mxu0 0
    %768 = vmatpush1.bf16.msra.mxu0 %v678
    %769 = vmatprep.subr.bf16.mxu0 0
    %770 = vmatpush1.bf16.msra.mxu0 %v679
    %771 = vmatprep.subr.bf16.mxu0 0
    %772 = vmatpush1.bf16.msra.mxu0 %v680
    %773 = vmatprep.subr.bf16.mxu0 0
    %774 = vmatpush1.bf16.msra.mxu0 %v681
    %775 = vmatprep.subr.bf16.mxu0 0
    %776 = vmatpush1.bf16.msra.mxu0 %v682
    %777 = vmatprep.subr.bf16.mxu0 0
    %778 = vmatpush1.bf16.msra.mxu0 %v683
    %779 = vmatprep.subr.bf16.mxu0 0
    %780 = vmatpush1.bf16.msra.mxu0 %v684
    %781 = vmatprep.subr.bf16.mxu0 0
    %782 = vmatpush1.bf16.msra.mxu0 %v685
    %783 = vmatprep.subr.bf16.mxu0 0
    %784 = vmatpush1.bf16.msra.mxu0 %v686
    %785 = vmatprep.subr.bf16.mxu0 0
    %786 = vmatpush1.bf16.msra.mxu0 %v687
    %787 = vmatprep.subr.bf16.mxu0 0
    %788 = vmatpush1.bf16.msra.mxu0 %v688
    %789 = vmatprep.subr.bf16.mxu0 0
    %790 = vmatpush1.bf16.msra.mxu0 %v689
    %791 = vmatprep.subr.bf16.mxu0 0
    %792 = vmatpush1.bf16.msra.mxu0 %v690
    %793 = vmatprep.subr.bf16.mxu0 0
    %794 = vmatpush1.bf16.msra.mxu0 %v691
    %795 = vmatprep.subr.bf16.mxu0 0
    %796 = vmatpush1.bf16.msra.mxu0 %v692
    %797 = vmatprep.subr.bf16.mxu0 0
    %798 = vmatpush1.bf16.msra.mxu0 %v693
    %799 = vmatprep.mubr.bf16.mxu0 %v463
    %800 = vmatmul.mubr.bf16.gmra.mrb[0].mxu0 %v462
    %v801 = vpop.f32.mrb[0].mxu0
    %v802 = vadd.f32 %v761, %v801
    %v803 = vpop.f32.mrb[0].mxu0
    %v804 = vpop.f32.mrb[0].mxu0
    %v805 = vadd.f32 %v764, %v804
    %v806 = vpop.f32.mrb[0].mxu0
    %807 = vdwg.mxu0
    %v808 = vpack.c.bf16 %v805, %v802
    %v810 = vunpack.c.l.b16 %v808
    %v811 = vunpack.c.h.b16 %v808
    %v812 = vpack.c.b16 %v810, %v810
    %v813 = vpack.c.b16 %v811, %v811
    %816 = vst [vmem:[#allocation8] sm:$0xf] %v812
    %817 = vst [vmem:[#allocation8 + $0x4] sm:$0xf] %v813
    // Predicated region
    $region34: #{mlp_forward.1} parent=1 // pred_check
      _
    $region35: #{mlp_forward.1} parent=1 // pred_check_branch
      %819 = sbr.rel (0) target = $region37
    $region36: #{mlp_forward.1} parent=1 // pred_region
      %s821 = ssub.s32 128, 128
      %822 = vsyncadd [#allocation4], %s821
      %s823 = sshll.u32 [#allocation8], 4
      %s824 = int_to_ptr.vmem [resolvable:$true] %s823
      %829 = dma.vmem_to_hbm [thread:$0]  %s824, 128, %s5, [#allocation4], 64, 64, 4
    $region37: #{mlp_forward.1} parent=1 // pred_fallthru
      _
    // Predicated region
    $region38: #{mlp_forward.1} parent=1 // pred_check
      _
    $region39: #{mlp_forward.1} parent=1 // pred_check_branch
      %831 = sbr.rel (0) target = $region41
    $region40: #{mlp_forward.1} parent=1 // pred_region
      %832 = dma.done [#allocation4], 128
    $region41: #{mlp_forward.1} parent=1 // pred_fallthru
      _
    %833 = vsyncpa [#allocation3], 1
    %834 = vsyncpa [#allocation6], 1
    %835 = vsyncpa [#allocation4], 1

</llo_original>
